<compile_context>
chip_gen: v5e
topology: v5e:2x2
jax: 0.10.0
libtpu: 0.0.40
codegen_flags: <defaults>
</compile_context>

<pallas_src>
import functools

import jax
import jax.numpy as jnp
from jax.experimental import pallas as pl
from jax.experimental.pallas import tpu as pltpu


def _channel_attention_kernel(x_ref, w1t_ref, w2t_ref, o_ref, *, inv_hw):
    # x_ref block: (Bt, C, HW), native input dtype, HW is the lane-dense axis.
    x = x_ref[...]

    # --- squeeze: global average pool over the flattened spatial axis.
    # fp32 accumulation; the result lives only on the reduced (Bt, C) path.
    y = jnp.sum(x.astype(jnp.float32), axis=2) * inv_hw            # (Bt, C) f32

    # --- excitation: Linear(C -> hidden_pad, no bias) + ReLU (MXU + VPU)
    h = jnp.maximum(
        jnp.dot(y, w1t_ref[...], preferred_element_type=jnp.float32), 0.0)

    # --- Linear(hidden_pad -> C, no bias) + Sigmoid (MXU + EUP)
    s = jax.nn.sigmoid(
        jnp.dot(h, w2t_ref[...], preferred_element_type=jnp.float32))

    # --- scale: broadcast the per-channel gate over spatial; only the small
    # gate is cast to the input dtype, the full tile stays in native dtype.
    scale = s.astype(x_ref.dtype)[:, :, None]                      # (Bt, C, 1)
    o_ref[...] = (x * scale).astype(o_ref.dtype)


def channel_attention(x, w1, w2, *, block_b=None):
    """x: (B, C, H, W). w1: (C//r, C) (PyTorch Linear weight). w2: (C, C//r)."""
    B, C, H, W = x.shape
    hidden = w1.shape[0]
    HW = H * W
    itemsize = jnp.dtype(x.dtype).itemsize

    # Lane-dense layout: flatten spatial dims in the wrapper (layout plumbing,
    # free for a contiguous (B, C, H, W) array).
    x2 = x.reshape(B, C, HW)

    # Pad the tiny hidden dim up to a multiple of 128 with zeros (exact:
    # padded w1t columns give h = relu(0) = 0 and padded w2t rows are zero).
    # Keeps weight tiles and the (Bt, hidden) intermediate lane-dense.
    hp = max(128, -(-hidden // 128) * 128)
    w1t = jnp.zeros((C, hp), jnp.float32).at[:, :hidden].set(
        jnp.asarray(w1, jnp.float32).T)
    w2t = jnp.zeros((hp, C), jnp.float32).at[:hidden, :].set(
        jnp.asarray(w2, jnp.float32).T)

    # Batch blocking: target multi-MiB tiles but keep >= 2 grid steps so both
    # v7x TensorCores get work; Bt must divide B.
    if block_b is None:
        bytes_per_image = C * HW * itemsize
        target_tile_bytes = 4 << 20
        bt = max(1, min(B, target_tile_bytes // max(bytes_per_image, 1)))
        if B >= 2:
            bt = min(bt, max(1, B // 2))
        while B % bt:
            bt -= 1
        block_b = bt
    assert B % block_b == 0
    grid_b = B // block_b

    # VMEM budget: in + out tiles, double-buffered, plus weights and slack.
    # Cap at 48 MiB so the request is also safe on v7x (64 MiB physical).
    tile_bytes = block_b * C * HW * itemsize
    vmem_needed = 4 * tile_bytes + 8 * C * hp * 4 + (1 << 20)
    vmem_limit = int(min(max(vmem_needed, 32 << 20), 48 << 20))

    kernel = functools.partial(_channel_attention_kernel, inv_hw=1.0 / HW)

    out = pl.pallas_call(
        kernel,
        out_shape=jax.ShapeDtypeStruct((B, C, HW), x.dtype),
        grid_spec=pltpu.PrefetchScalarGridSpec(
            num_scalar_prefetch=0,
            grid=(grid_b,),
            in_specs=[
                pl.BlockSpec((block_b, C, HW), lambda b: (b, 0, 0)),
                pl.BlockSpec((C, hp), lambda b: (0, 0)),
                pl.BlockSpec((hp, C), lambda b: (0, 0)),
            ],
            out_specs=pl.BlockSpec((block_b, C, HW), lambda b: (b, 0, 0)),
        ),
        compiler_params=pltpu.CompilerParams(
            dimension_semantics=("parallel",),
            vmem_limit_bytes=vmem_limit,
        ),
    )(x2, w1t, w2t)
    return out.reshape(B, C, H, W)


if __name__ == "__main__":
    # Small shapes consistent with the module: in_channels=32, reduction=16.
    B, C, H, W = 2, 32, 16, 16
    reduction = 16
    hidden = C // reduction

    key = jax.random.PRNGKey(0)
    kx, k1, k2 = jax.random.split(key, 3)
    x = jax.random.normal(kx, (B, C, H, W), dtype=jnp.float32)
    # Deterministic synthetic weights (shapes match nn.Linear weights, bias=False).
    w1 = jax.random.normal(k1, (hidden, C), dtype=jnp.float32) * 0.1  # Linear(C -> hidden)
    w2 = jax.random.normal(k2, (C, hidden), dtype=jnp.float32) * 0.1  # Linear(hidden -> C)

    out = channel_attention(x, w1, w2)
    out = jax.block_until_ready(out)

    # Pure-JAX reference for sanity.
    y_ref = jnp.mean(x, axis=(2, 3))                         # (B, C)
    h_ref = jnp.maximum(y_ref @ w1.T, 0.0)                   # (B, hidden)
    s_ref = jax.nn.sigmoid(h_ref @ w2.T)                     # (B, C)
    ref = x * s_ref[:, :, None, None]
    assert jnp.allclose(out, ref, atol=1e-5, rtol=1e-5), "mismatch vs reference"

    print("KERNEL_OK")
</pallas_src>

<mosaic_0001>
module attributes {stable_mosaic.version = 11 : i64} {
  func.func @_channel_attention_kernel(%arg0: i32, %arg1: memref<1x32x256xf32, #tpu.memory_space<vmem>>, %arg2: memref<32x128xf32, #tpu.memory_space<vmem>>, %arg3: memref<128x32xf32, #tpu.memory_space<vmem>>, %arg4: memref<1x32x256xf32, #tpu.memory_space<vmem>>) attributes {dimension_semantics = [#tpu.dimension_semantics<parallel>], iteration_bounds = array<i64: 2>, scalar_prefetch = 0 : i64, scratch_operands = 0 : i64, tpu.core_type = #tpu.core_type<tc>, window_params = [{transform_indices = @transform_0, window_bounds = array<i64: 1, 32, 256>}, {pipeline_mode = #tpu.pipeline_mode<synchronous>, transform_indices = @transform_1, window_bounds = array<i64: 32, 128>}, {pipeline_mode = #tpu.pipeline_mode<synchronous>, transform_indices = @transform_2, window_bounds = array<i64: 128, 32>}, {transform_indices = @transform_3, window_bounds = array<i64: 1, 32, 256>}]} {
    %c0 = arith.constant 0 : index
    %c0_0 = arith.constant 0 : index
    %c0_1 = arith.constant 0 : index
    %0 = vector.load %arg1[%c0, %c0_0, %c0_1] : memref<1x32x256xf32, #tpu.memory_space<vmem>>, vector<1x32x256xf32>
    %cst = arith.constant dense<0.000000e+00> : vector<1x32xf32>
    %1 = vector.multi_reduction <add>, %0, %cst [2] : vector<1x32x256xf32> to vector<1x32xf32>
    %cst_2 = arith.constant 3.906250e-03 : f32
    %2 = vector.broadcast %cst_2 : f32 to vector<1x32xf32>
    %3 = arith.mulf %1, %2 : vector<1x32xf32>
    %c0_3 = arith.constant 0 : index
    %c0_4 = arith.constant 0 : index
    %4 = vector.load %arg2[%c0_3, %c0_4] : memref<32x128xf32, #tpu.memory_space<vmem>>, vector<32x128xf32>
    %cst_5 = arith.constant dense<0.000000e+00> : vector<1x128xf32>
    %5 = tpu.matmul %3, %4, %cst_5 {dimension_numbers = #tpu.dot_dimension_numbers<[1], [0], [0], [1], [0, 0, 1, 1], [], []>} : vector<1x32xf32>, vector<32x128xf32>, vector<1x128xf32> -> vector<1x128xf32>
    %cst_6 = arith.constant 0.000000e+00 : f32
    %6 = vector.broadcast %cst_6 : f32 to vector<1x128xf32>
    %7 = arith.maximumf %5, %6 : vector<1x128xf32>
    %c0_7 = arith.constant 0 : index
    %c0_8 = arith.constant 0 : index
    %8 = vector.load %arg3[%c0_7, %c0_8] : memref<128x32xf32, #tpu.memory_space<vmem>>, vector<128x32xf32>
    %cst_9 = arith.constant dense<0.000000e+00> : vector<1x32xf32>
    %9 = tpu.matmul %7, %8, %cst_9 {dimension_numbers = #tpu.dot_dimension_numbers<[1], [0], [0], [1], [0, 0, 1, 1], [], []>} : vector<1x128xf32>, vector<128x32xf32>, vector<1x32xf32> -> vector<1x32xf32>
    %10 = arith.negf %9 : vector<1x32xf32>
    %11 = math.exp %10 : vector<1x32xf32>
    %cst_10 = arith.constant 1.000000e+00 : f32
    %12 = vector.broadcast %cst_10 : f32 to vector<1x32xf32>
    %13 = arith.addf %12, %11 : vector<1x32xf32>
    %14 = arith.divf %12, %13 : vector<1x32xf32>
    %15 = vector.shape_cast %14 : vector<1x32xf32> to vector<1x32x1xf32>
    %16 = vector.broadcast %15 : vector<1x32x1xf32> to vector<1x32x256xf32>
    %17 = arith.mulf %0, %16 : vector<1x32x256xf32>
    %c0_11 = arith.constant 0 : index
    %c0_12 = arith.constant 0 : index
    %c0_13 = arith.constant 0 : index
    %18 = vector.load %arg4[%c0_11, %c0_12, %c0_13] : memref<1x32x256xf32, #tpu.memory_space<vmem>>, vector<1x32x256xf32>
    tpu.vector_store %arg4[%c0_11, %c0_12, %c0_13], %17 {strides = array<i32>} : memref<1x32x256xf32, #tpu.memory_space<vmem>>, vector<1x32x256xf32>,
    return
  }
  func.func @transform_0(%arg0: i32) -> (i32, i32, i32) {
    %c0_i32 = arith.constant 0 : i32
    %c0_i32_0 = arith.constant 0 : i32
    %c0_i32_1 = arith.constant 0 : i32
    return %arg0, %c0_i32, %c0_i32_0 : i32, i32, i32
  }
  func.func @transform_1(%arg0: i32) -> (i32, i32) {
    %c0_i32 = arith.constant 0 : i32
    %c0_i32_0 = arith.constant 0 : i32
    %c0_i32_1 = arith.constant 0 : i32
    return %c0_i32, %c0_i32_0 : i32, i32
  }
  func.func @transform_2(%arg0: i32) -> (i32, i32) {
    %c0_i32 = arith.constant 0 : i32
    %c0_i32_0 = arith.constant 0 : i32
    %c0_i32_1 = arith.constant 0 : i32
    return %c0_i32, %c0_i32_0 : i32, i32
  }
  func.func @transform_3(%arg0: i32) -> (i32, i32, i32) {
    %c0_i32 = arith.constant 0 : i32
    %c0_i32_0 = arith.constant 0 : i32
    %c0_i32_1 = arith.constant 0 : i32
    return %arg0, %c0_i32, %c0_i32_0 : i32, i32, i32
  }
}

</mosaic_0001>

<llo_original>
// kernel: tpu_custom_call.1
$region0: #{tpu_custom_call.1}
  #allocation0 [shape = 'u32[]', space=smem, size = 0x4, offset = 0x4, fixed_abs, tag = 'smem constant byte address 0x4 - core index']
  #allocation1 [shape = 'u32[72,128]{1,0:T(1,128)}', space=vmem, size = 0x9000, scoped, tag = 'internal scratch']
  %s0 = inlined_call_operand.vmem [shape: f32[2,32,256], index: 0, kind: input, shape index: {}]
  %s1 = inlined_call_operand.vmem [shape: f32[32,128], index: 1, kind: input, shape index: {}]
  %s2 = inlined_call_operand.vmem [shape: f32[128,32], index: 2, kind: input, shape index: {}]
  %s3 = inlined_call_operand.hbm [shape: f32[2,32,256], index: 3, kind: output, shape index: {}]
  %s4 = sld [smem:[#allocation0]]
  $region45: #{tpu_custom_call.1} parent=0
    _
  %s6 = ssub.s32 1, %s4
  %s7 = scalar_select 0, %s6, %s4
  $region1: #{tpu_custom_call.1} parent=0
    #allocation2 [shape = 'u8[65536]{0}', space=vmem, size = 0x10000, scoped, tag = 'output window, operand 0']
    #allocation3 [shape = 's32[2]{0}', space=sflag, size = 0x8, scoped, tag = 'scoped memory for tpu_custom_call.1']
    %8 = vsyncpa [#allocation3], 0
    %s9 = scalar_lea.sflag [#allocation3], 1
    %10 = vsyncpa %s9, 0
    loop: start=0, step=1, limit=4
    $region2: #{tpu_custom_call.1} parent=1 // loop_pre_header
      _
    $region3: #{tpu_custom_call.1} parent=1 // loop_header
      %s12 = sphi 0, %s16
      %p13 = scmp.ge.s32.totalorder %s12, 4
      %s22 = sphi 0, %s24
      %s25 = sphi 0, %s22
      %s26 = sphi 0, %s25
      %s42 = sphi 0, %s26
      %s46 = sphi 0, %s46
      %s48 = sphi 0, %s46
      %s49 = sphi 0, %s48
      %s63 = sphi 0, %s49
      %s67 = sphi 0, %s67
      %s69 = sphi 0, %s67
      %s70 = sphi 0, %s69
      %s84 = sphi 0, %s70
      %s90 = sphi 0, %s92
      %s93 = sphi 0, %s90
      %s94 = sphi 0, %s93
      %s110 = sphi 0, %s94
    $region4: #{tpu_custom_call.1} parent=1 // loop_header_branch
      %15 = sbr.rel (%p13) target = $region8
    $region5: #{tpu_custom_call.1} parent=1 // loop_body
      %s17 = ssub.s32 %s12, 1
      %s18 = ssub.s32 %s12, 2
      %s19 = sadd.s32 %s12, 1
      %s20 = ssub.s32 %s12, %s19
      %p21 = scmp.eq.s32.totalorder %s20, 0
      %s23 = sadd.s32 %s22, 1
      %s24 = scalar_select %p21, %s22, %s23
      %p27 = pneg %p21
      %p28 = scmp.eq.s32.totalorder %s12, 1
      %p29 = por %p27, %p28
      %p30 = scmp.ne.s32.totalorder %s22, %s25
      %p31 = scmp.eq.s32.totalorder %s12, 0
      %p32 = por %p30, %p31
      %p33 = scmp.ne.s32.totalorder %s22, %s25
      %p34 = scmp.eq.s32.totalorder %s17, 1
      %p35 = por %p33, %p34
      %p36 = scmp.ne.s32.totalorder %s25, %s26
      %p37 = scmp.eq.s32.totalorder %s17, 0
      %p38 = por %p36, %p37
      %p39 = scmp.ne.s32.totalorder %s25, %s26
      %p40 = scmp.eq.s32.totalorder %s18, 1
      %p41 = por %p39, %p40
      %p43 = scmp.ne.s32.totalorder %s26, %s42
      %p44 = scmp.eq.s32.totalorder %s18, 0
      %p45 = por %p43, %p44
      %s47 = sadd.s32 %s46, 1
      %p50 = scmp.eq.s32.totalorder %s12, 1
      %p51 = scmp.ne.s32.totalorder %s46, %s48
      %p52 = scmp.eq.s32.totalorder %s12, 0
      %p53 = por %p51, %p52
      %p54 = scmp.ne.s32.totalorder %s46, %s48
      %p55 = scmp.eq.s32.totalorder %s17, 1
      %p56 = por %p54, %p55
      %p57 = scmp.ne.s32.totalorder %s48, %s49
      %p58 = scmp.eq.s32.totalorder %s17, 0
      %p59 = por %p57, %p58
      %p60 = scmp.ne.s32.totalorder %s48, %s49
      %p61 = scmp.eq.s32.totalorder %s18, 1
      %p62 = por %p60, %p61
      %p64 = scmp.ne.s32.totalorder %s49, %s63
      %p65 = scmp.eq.s32.totalorder %s18, 0
      %p66 = por %p64, %p65
      %s68 = sadd.s32 %s67, 1
      %p71 = scmp.eq.s32.totalorder %s12, 1
      %p72 = scmp.ne.s32.totalorder %s67, %s69
      %p73 = scmp.eq.s32.totalorder %s12, 0
      %p74 = por %p72, %p73
      %p75 = scmp.ne.s32.totalorder %s67, %s69
      %p76 = scmp.eq.s32.totalorder %s17, 1
      %p77 = por %p75, %p76
      %p78 = scmp.ne.s32.totalorder %s69, %s70
      %p79 = scmp.eq.s32.totalorder %s17, 0
      %p80 = por %p78, %p79
      %p81 = scmp.ne.s32.totalorder %s69, %s70
      %p82 = scmp.eq.s32.totalorder %s18, 1
      %p83 = por %p81, %p82
      %p85 = scmp.ne.s32.totalorder %s70, %s84
      %p86 = scmp.eq.s32.totalorder %s18, 0
      %p87 = por %p85, %p86
      %s88 = ssub.s32 %s12, %s19
      %p89 = scmp.eq.s32.totalorder %s88, 0
      %s91 = sadd.s32 %s90, 1
      %s92 = scalar_select %p89, %s90, %s91
      %p95 = pneg %p89
      %p96 = scmp.eq.s32.totalorder %s12, 1
      %p97 = por %p95, %p96
      %p98 = scmp.ne.s32.totalorder %s90, %s93
      %p99 = scmp.eq.s32.totalorder %s12, 0
      %p100 = por %p98, %p99
      %p101 = scmp.ne.s32.totalorder %s90, %s93
      %p102 = scmp.eq.s32.totalorder %s17, 1
      %p103 = por %p101, %p102
      %p104 = scmp.ne.s32.totalorder %s93, %s94
      %p105 = scmp.eq.s32.totalorder %s17, 0
      %p106 = por %p104, %p105
      %p107 = scmp.ne.s32.totalorder %s93, %s94
      %p108 = scmp.eq.s32.totalorder %s18, 1
      %p109 = por %p107, %p108
      %p111 = scmp.ne.s32.totalorder %s94, %s110
      %p112 = scmp.eq.s32.totalorder %s18, 0
      %p113 = por %p111, %p112
      %p114 = scmp.le.s32.totalorder 1, %s12
      %p115 = scmp.lt.s32.totalorder %s12, 3
      %p116 = pnand %p114, %p115
      %p117 = pneg %p116
      // Predicated region
      $region9: #{tpu_custom_call.1} parent=5 // pred_check
        _
      $region10: #{tpu_custom_call.1} parent=5 // pred_check_branch
        %119 = sbr.rel (%p116) target = $region12
      $region11: #{tpu_custom_call.1} parent=5 // pred_region
        %s120 = ssub.s32 %s12, 1
        // Predicated region
        $region13: #{tpu_custom_call.1} parent=11 // pred_check
          %p121 = pneg %p59
        $region14: #{tpu_custom_call.1} parent=11 // pred_check_branch
          %123 = sbr.rel (%p121) target = $region16
        $region15: #{tpu_custom_call.1} parent=11 // pred_region
          _
        $region16: #{tpu_custom_call.1} parent=11 // pred_fallthru
          _
        // Predicated region
        $region17: #{tpu_custom_call.1} parent=11 // pred_check
          %p124 = pneg %p80
        $region18: #{tpu_custom_call.1} parent=11 // pred_check_branch
          %126 = sbr.rel (%p124) target = $region20
        $region19: #{tpu_custom_call.1} parent=11 // pred_region
          _
        $region20: #{tpu_custom_call.1} parent=11 // pred_fallthru
          _
      $region12: #{tpu_custom_call.1} parent=5 // pred_fallthru
        _
      %p127 = scmp.lt.s32.totalorder %s12, 2
      // Predicated region
      $region21: #{tpu_custom_call.1} parent=5 // pred_check
        %p128 = pneg %p127
      $region22: #{tpu_custom_call.1} parent=5 // pred_check_branch
        %130 = sbr.rel (%p128) target = $region24
      $region23: #{tpu_custom_call.1} parent=5 // pred_region
        // Predicated region
        $region25: #{tpu_custom_call.1} parent=23 // pred_check
          %p131 = pneg %p32
        $region26: #{tpu_custom_call.1} parent=23 // pred_check_branch
          %133 = sbr.rel (%p131) target = $region28
        $region27: #{tpu_custom_call.1} parent=23 // pred_region
          %p134 = scmp.lt.s32.totalorder %s12, 1
          %s135 = scalar_select %p134, %s12, 1
          %s136 = smul.addr %s135, 8
          %s137 = smul.addr %s136, 8
          %s138 = scalar_lea.vmem %s0, %s137
        $region28: #{tpu_custom_call.1} parent=23 // pred_fallthru
          _
      $region24: #{tpu_custom_call.1} parent=5 // pred_fallthru
        _
      %p139 = scmp.le.s32.totalorder 1, %s12
      %p140 = scmp.lt.s32.totalorder %s12, 3
      %p141 = pnand %p139, %p140
      %p142 = pneg %p141
      // Predicated region
      $region29: #{tpu_custom_call.1} parent=5 // pred_check
        _
      $region30: #{tpu_custom_call.1} parent=5 // pred_check_branch
        %144 = sbr.rel (%p141) target = $region32
      $region31: #{tpu_custom_call.1} parent=5 // pred_region
        %s145 = ssub.s32 %s12, 1
        %p146 = scmp.lt.s32.totalorder %s17, 1
        %s147 = scalar_select %p146, %s17, 1
        %s148 = smul.addr %s147, 8
        %s149 = smul.addr %s148, 8
        %s150 = scalar_lea.vmem %s0, %s149
        %p151 = pneg %p38
        %p152 = pneg %p35
        %p153 = pneg %p59
        %p154 = pneg %p56
        %p155 = pneg %p80
        %p156 = pneg %p77
        %p157 = pneg %p106
        %p158 = pneg %p103
        %s159 = sand.u32 %s93, 1
        %s160 = scalar_lea.sflag [#allocation3], %s159
        %s161 = sand.u32 %s93, 1
        %s162 = smul.addr %s161, 64
        %s163 = scalar_lea.vmem [#allocation2], %s162
        %p164 = scmp.lt.s32.totalorder %s17, 1
        %s165 = scalar_select %p164, %s17, 1
        %s166 = smul.addr %s165, 8
        %s167 = smul.addr %s166, 8
        %s168 = scalar_lea.vmem %s0, %s167
        %v169 = vld [vmem:[%s168] sm:$0xff]
        %v170 = vld [vmem:[%s168 + $0x8] sm:$0xff]
        %v171 = vld [vmem:[%s168 + $0x10] sm:$0xff]
        %v172 = vld [vmem:[%s168 + $0x18] sm:$0xff]
        %v173 = vld [vmem:[%s168 + $0x20] sm:$0xff]
        %v174 = vld [vmem:[%s168 + $0x28] sm:$0xff]
        %v175 = vld [vmem:[%s168 + $0x30] sm:$0xff]
        %v176 = vld [vmem:[%s168 + $0x38] sm:$0xff]
        %v177 = vadd.f32 %v169, %v170
        %178 = vadd.xlane.f32.xlu0 %v177
        %v179 = vpop.xlane.xlu0 %178
        %v180 = vadd.f32 %v171, %v172
        %181 = vadd.xlane.f32.xlu0 %v180
        %v182 = vpop.xlane.xlu0 %181
        %v183 = vadd.f32 %v173, %v174
        %184 = vadd.xlane.f32.xlu0 %v183
        %v185 = vpop.xlane.xlu0 %184
        %v186 = vadd.f32 %v175, %v176
        %187 = vadd.xlane.f32.xlu0 %v186
        %v188 = vpop.xlane.xlu0 %187
        %v189 = vmul.f32 %v179, 0.00390625
        %v190 = vmul.f32 %v182, 0.00390625
        %v191 = vmul.f32 %v185, 0.00390625
        %v192 = vmul.f32 %v188, 0.00390625
        %v193 = vld [vmem:[%s1] sm:$0xff]
        %v194 = vld [vmem:[%s1 + $0x8] sm:$0xff]
        %v195 = vld [vmem:[%s1 + $0x10] sm:$0xff]
        %v196 = vld [vmem:[%s1 + $0x18] sm:$0xff]
        %v201 = vlaneseq
        %v202 = vand.u32 %v201, 127
        %v203 = vperm.slane %v189, %v202
        %v204 = vadd.s32 %v202, 4294967288
        %v205 = vperm.slane %v190, %v204
        %vm206 = vcmask 130112
        %v207 = vsel %vm206, %v205, %v203
        %v208 = vadd.s32 %v202, 4294967280
        %v209 = vperm.slane %v191, %v208
        %vm210 = vcmask 195712
        %v211 = vsel %vm210, %v209, %v207
        %v212 = vadd.s32 %v202, 4294967272
        %v213 = vperm.slane %v192, %v212
        %vm214 = vcmask 261312
        %v215 = vsel %vm214, %v213, %v211
        %vm216 = vcmask 261120
        %v217 = vsel %vm216, %v215, 0
        %219 = vmatpush.msra.mxu0 0.0
        %220 = vmatpush.msra.mxu0 0.0
        %221 = vmatpush.msra.mxu0 0.0
        %222 = vmatpush.msra.mxu0 0.0
        %223 = vmatpush.msra.mxu0 0.0
        %224 = vmatpush.msra.mxu0 0.0
        %225 = vmatpush.msra.mxu0 0.0
        %226 = vmatpush.msra.mxu0 0.0
        %227 = vmatpush.msra.mxu0 0.0
        %228 = vmatpush.msra.mxu0 0.0
        %229 = vmatpush.msra.mxu0 0.0
        %230 = vmatpush.msra.mxu0 0.0
        %231 = vmatpush.msra.mxu0 %v196
        %232 = vmatpush.msra.mxu0 %v195
        %233 = vmatpush.msra.mxu0 %v194
        %234 = vmatpush.msra.mxu0 %v193
        %235 = vmatmul.f32.gmra.mxu0 %v217
        %v236 = vpop.f32.mrf.mxu0
        %v237 = vadd.f32 0.0, %v236
        %238 = vdwg.mxu0
        %v239 = vmax.f32 %v237, 0.0
        %v240 = vld [vmem:[%s2] sm:$0xff]
        %v241 = vld [vmem:[%s2 + $0x8] sm:$0xff]
        %v242 = vld [vmem:[%s2 + $0x10] sm:$0xff]
        %v243 = vld [vmem:[%s2 + $0x18] sm:$0xff]
        %v244 = vld [vmem:[%s2 + $0x20] sm:$0xff]
        %v245 = vld [vmem:[%s2 + $0x28] sm:$0xff]
        %v246 = vld [vmem:[%s2 + $0x30] sm:$0xff]
        %v247 = vld [vmem:[%s2 + $0x38] sm:$0xff]
        %v248 = vld [vmem:[%s2 + $0x40] sm:$0xff]
        %v249 = vld [vmem:[%s2 + $0x48] sm:$0xff]
        %v250 = vld [vmem:[%s2 + $0x50] sm:$0xff]
        %v251 = vld [vmem:[%s2 + $0x58] sm:$0xff]
        %v252 = vld [vmem:[%s2 + $0x60] sm:$0xff]
        %v253 = vld [vmem:[%s2 + $0x68] sm:$0xff]
        %v254 = vld [vmem:[%s2 + $0x70] sm:$0xff]
        %v255 = vld [vmem:[%s2 + $0x78] sm:$0xff]
        %256 = vmatpush.msra.mxu0 %v255
        %257 = vmatpush.msra.mxu0 %v254
        %258 = vmatpush.msra.mxu0 %v253
        %259 = vmatpush.msra.mxu0 %v252
        %260 = vmatpush.msra.mxu0 %v251
        %261 = vmatpush.msra.mxu0 %v250
        %262 = vmatpush.msra.mxu0 %v249
        %263 = vmatpush.msra.mxu0 %v248
        %264 = vmatpush.msra.mxu0 %v247
        %265 = vmatpush.msra.mxu0 %v246
        %266 = vmatpush.msra.mxu0 %v245
        %267 = vmatpush.msra.mxu0 %v244
        %268 = vmatpush.msra.mxu0 %v243
        %269 = vmatpush.msra.mxu0 %v242
        %270 = vmatpush.msra.mxu0 %v241
        %271 = vmatpush.msra.mxu0 %v240
        %272 = vmatmul.f32.gmra.mxu0 %v239
        %v273 = vpop.f32.mrf.mxu0
        %v274 = vadd.f32 0.0, %v273
        %275 = vdwg.mxu0
        %v276 = vxor.u32 %v274, 2147483648
        %v277 = vmul.f32 %v276, 1.442695
        %v278 = vpow.pop %v277
        %v279 = vadd.f32 %v278, 1.0
        %v280 = vrcp.pop %v279
        %v281 = vmul.f32 %v279, %v280
        %v282 = vsub.f32 1.0, %v281
        %v283 = vmul.f32 %v280, %v282
        %v284 = vadd.f32 %v280, %v283
        %vm285 = vweird.f32 %v279
        %vm286 = vweird.f32 %v280
        %vm287 = vmor %vm285, %vm286
        %v288 = vsel %vm287, %v280, %v284
        %v289 = vand.u32 2147483647, %v279
        %vm290 = vcmp.eq.f32.partialorder %v289, 8.507059e+37
        %v291 = vand.u32 %v279, 2147483648
        %v292 = vor.u32 1.1754944e-38, %v291
        %v293 = vsel %vm290, %v292, %v288
        %v294 = vmul.f32 1.0, %v293
        %v295 = vperm.slane %v294, 0
        %v296 = vlaneseq
        %v297 = vshrl.u32 %v296, 7
        %299 = vset.pattern.permute.xlu0 %v297
        %300 = vperm.xlu0 %299, %v295
        %v301 = vpop.permute.xlu0 %300
        %v302 = vlaneseq
        %v303 = vshrl.u32 %v302, 7
        %v304 = vadd.s32 %v303, 8
        %305 = vset.pattern.permute.xlu0 %v304
        %306 = vperm.xlu0 %305, %v295
        %v307 = vpop.permute.xlu0 %306
        %v308 = vlaneseq
        %v309 = vshrl.u32 %v308, 7
        %v310 = vadd.s32 %v309, 16
        %311 = vset.pattern.permute.xlu0 %v310
        %312 = vperm.xlu0 %311, %v295
        %v313 = vpop.permute.xlu0 %312
        %v314 = vlaneseq
        %v315 = vshrl.u32 %v314, 7
        %v316 = vadd.s32 %v315, 24
        %317 = vset.pattern.permute.xlu0 %v316
        %318 = vperm.xlu0 %317, %v295
        %v319 = vpop.permute.xlu0 %318
        %v320 = vmul.f32 %v169, %v301
        %v321 = vmul.f32 %v170, %v301
        %v322 = vmul.f32 %v171, %v307
        %v323 = vmul.f32 %v172, %v307
        %v324 = vmul.f32 %v173, %v313
        %v325 = vmul.f32 %v174, %v313
        %v326 = vmul.f32 %v175, %v319
        %v327 = vmul.f32 %v176, %v319
        %328 = vst [vmem:[%s163] sm:$0xff] %v320
        %329 = vst [vmem:[%s163 + $0x8] sm:$0xff] %v321
        %330 = vst [vmem:[%s163 + $0x10] sm:$0xff] %v322
        %331 = vst [vmem:[%s163 + $0x18] sm:$0xff] %v323
        %332 = vst [vmem:[%s163 + $0x20] sm:$0xff] %v324
        %333 = vst [vmem:[%s163 + $0x28] sm:$0xff] %v325
        %334 = vst [vmem:[%s163 + $0x30] sm:$0xff] %v326
        %335 = vst [vmem:[%s163 + $0x38] sm:$0xff] %v327
        %s336 = sand.u32 %s93, 1
        %s337 = scalar_lea.sflag [#allocation3], %s336
        %s338 = sand.u32 %s93, 1
        %s339 = smul.addr %s338, 64
        %s340 = scalar_lea.vmem [#allocation2], %s339
        // Predicated region
        $region33: #{tpu_custom_call.1} parent=31 // pred_check
          %p341 = pneg %p103
        $region34: #{tpu_custom_call.1} parent=31 // pred_check_branch
          %343 = sbr.rel (%p341) target = $region36
        $region35: #{tpu_custom_call.1} parent=31 // pred_region
          %345 = vsyncadd %s337, 0
          %s346 = smul.addr %s17, 8
          %s347 = smul.addr %s346, 8
          %s348 = scalar_lea.hbm %s3, %s347
          %s349 = sshll.u32 %s340, 4
          %s350 = int_to_ptr.vmem [resolvable:$true] %s349
          %s351 = sshll.u32 %s348, 4
          %s352 = int_to_ptr.hbm [resolvable:$true] %s351
          %357 = dma.vmem_to_hbm [thread:$0]  %s350, 1024, %s352, %s337, 256, 256, 16
        $region36: #{tpu_custom_call.1} parent=31 // pred_fallthru
          _
      $region32: #{tpu_custom_call.1} parent=5 // pred_fallthru
        _
      %p358 = scmp.le.s32.totalorder 2, %s12
      // Predicated region
      $region37: #{tpu_custom_call.1} parent=5 // pred_check
        %p359 = pneg %p358
      $region38: #{tpu_custom_call.1} parent=5 // pred_check_branch
        %361 = sbr.rel (%p359) target = $region40
      $region39: #{tpu_custom_call.1} parent=5 // pred_region
        %s362 = ssub.s32 %s12, 2
        // Predicated region
        $region41: #{tpu_custom_call.1} parent=39 // pred_check
          %p363 = pneg %p109
        $region42: #{tpu_custom_call.1} parent=39 // pred_check_branch
          %365 = sbr.rel (%p363) target = $region44
        $region43: #{tpu_custom_call.1} parent=39 // pred_region
          %s366 = sand.u32 %s94, 1
          %s367 = scalar_lea.sflag [#allocation3], %s366
          %s368 = sand.u32 %s94, 1
          %s369 = smul.addr %s368, 64
          %s370 = scalar_lea.vmem [#allocation2], %s369
          %372 = dma.done %s367, 1024
        $region44: #{tpu_custom_call.1} parent=39 // pred_fallthru
          _
      $region40: #{tpu_custom_call.1} parent=5 // pred_fallthru
        _
    $region6: #{tpu_custom_call.1} parent=1 // loop_footer
      %s16 = sadd.s32 1, %s12
    $region7: #{tpu_custom_call.1} parent=1 // loop_footer_branch
      %11 = sbr.rel target = $region3
    $region8: #{tpu_custom_call.1} parent=1 // loop_exit
      _
    %373 = vsyncpa [#allocation3], 1
    %s374 = scalar_lea.sflag [#allocation3], 1
    %375 = vsyncpa %s374, 1

</llo_original>
